<compile_context>
chip_gen: v7x
topology: tpu7x:2x2x1
jax: 0.10.0
libtpu: 0.0.40
codegen_flags: <defaults>
</compile_context>

<pallas_src>
import jax
import jax.numpy as jnp
from jax.experimental import pallas as pl
from jax.experimental.pallas import tpu as pltpu


def _scale_conv1x1_kernel(s_ref, w_ref, x_ref, o_ref):
    # Fold the per-channel scale into the weight tile: touches Cout_blk*Cin elems
    # (fewer than HW*Cin) and stays grid-invariant if M is ever tiled.
    w_scaled = w_ref[...] * s_ref[...]            # (tCo, Cin) * (1, Cin), f32 VPU
    # bf16 operands on the MXU, f32 accumulation.
    o_ref[...] = jnp.dot(
        w_scaled.astype(jnp.bfloat16),
        x_ref[...].astype(jnp.bfloat16),
        preferred_element_type=jnp.float32,
    ).astype(o_ref.dtype)


def fused_scale_conv1x1(x_nchw, scale_nc11, weight_oi11):
    """Computes Conv2d_1x1(scale * x), identical to the PyTorch module."""
    N, Cin, H, W = x_nchw.shape
    Cout = weight_oi11.shape[0]
    HW = H * W

    # Glue: only free reshapes of already-contiguous data (no transposes).
    x3 = x_nchw.reshape(N, Cin, HW)          # (N, Cin, HW)
    s3 = scale_nc11.reshape(N, 1, Cin)       # per-sample per-channel scale
    w2 = weight_oi11.reshape(Cout, Cin)      # (Cout, Cin) native layout

    # Split Cout so there are >= 2 parallel blocks (v7x: one per TensorCore).
    t_co = 80 if (Cout % 80 == 0) else Cout
    n_co = Cout // t_co

    cost = pl.CostEstimate(
        flops=2 * N * HW * Cin * Cout,
        transcendentals=0,
        bytes_accessed=4 * (N * Cin * HW + N * Cin + Cout * Cin + N * Cout * HW),
    )

    out3 = pl.pallas_call(
        _scale_conv1x1_kernel,
        out_shape=jax.ShapeDtypeStruct((N, Cout, HW), x_nchw.dtype),
        grid=(N, n_co),
        in_specs=[
            pl.BlockSpec((None, 1, Cin), lambda n, j: (n, 0, 0)),    # scale
            pl.BlockSpec((t_co, Cin), lambda n, j: (j, 0)),          # weight tile
            pl.BlockSpec((None, Cin, HW), lambda n, j: (n, 0, 0)),   # activations
        ],
        out_specs=pl.BlockSpec((None, t_co, HW), lambda n, j: (n, j, 0)),
        compiler_params=pltpu.CompilerParams(
            dimension_semantics=("parallel", "parallel"),
        ),
        cost_estimate=cost,
    )(s3, w2, x3)

    # Free reshape back to NCHW.
    return out3.reshape(N, Cout, H, W)


if __name__ == "__main__":
    # Shapes implied by the module: x405 (1,960,14,14), x410 (1,960,1,1),
    # conv weight (160, 960, 1, 1), no bias.
    N, Cin, H, W, Cout = 1, 960, 14, 14, 160

    key = jax.random.PRNGKey(0)
    k1, k2, k3 = jax.random.split(key, 3)
    x405 = jax.random.normal(k1, (N, Cin, H, W), dtype=jnp.float32)
    x410 = jax.random.normal(k2, (N, Cin, 1, 1), dtype=jnp.float32)
    w = jax.random.normal(k3, (Cout, Cin, 1, 1), dtype=jnp.float32) * 0.02

    out = jax.jit(fused_scale_conv1x1)(x405, x410, w)
    out = jax.block_until_ready(out)

    # Reference in plain JAX f32 (scale + 1x1 conv == einsum over channels).
    ref = jnp.einsum("nchw,oc->nohw", x410 * x405, w.reshape(Cout, Cin))
    assert out.shape == (N, Cout, H, W)
    # bf16 MXU operands with f32 accumulation over K=960 -> loosened tolerance.
    assert jnp.allclose(out, ref, atol=2e-2, rtol=2e-2), float(
        jnp.max(jnp.abs(out - ref))
    )

    print("KERNEL_OK")
</pallas_src>

<mosaic_0001>
module attributes {stable_mosaic.version = 11 : i64} {
  func.func @_scale_conv1x1_kernel(%arg0: i32, %arg1: i32, %arg2: memref<1x1x960xf32, #tpu.memory_space<vmem>>, %arg3: memref<80x960xf32, #tpu.memory_space<vmem>>, %arg4: memref<1x960x196xf32, #tpu.memory_space<vmem>>, %arg5: memref<1x80x196xf32, #tpu.memory_space<vmem>>) attributes {dimension_semantics = [#tpu.dimension_semantics<parallel>, #tpu.dimension_semantics<parallel>], iteration_bounds = array<i64: 1, 2>, scalar_prefetch = 0 : i64, scratch_operands = 0 : i64, tpu.core_type = #tpu.core_type<tc>, window_params = [{transform_indices = @transform_0, window_bounds = array<i64: 1, 1, 960>}, {transform_indices = @transform_1, window_bounds = array<i64: 80, 960>}, {transform_indices = @transform_2, window_bounds = array<i64: 1, 960, 196>}, {transform_indices = @transform_3, window_bounds = array<i64: 1, 80, 196>}]} {
    %c0 = arith.constant 0 : index
    %c0_0 = arith.constant 0 : index
    %0 = vector.load %arg3[%c0, %c0_0] : memref<80x960xf32, #tpu.memory_space<vmem>>, vector<80x960xf32>
    %c0_1 = arith.constant 0 : index
    %c0_2 = arith.constant 0 : index
    %c0_3 = arith.constant 0 : index
    %1 = vector.load %arg2[%c0_1, %c0_2, %c0_3] : memref<1x1x960xf32, #tpu.memory_space<vmem>>, vector<1x1x960xf32>
    %2 = vector.shape_cast %1 : vector<1x1x960xf32> to vector<1x960xf32>
    %3 = vector.broadcast %2 : vector<1x960xf32> to vector<80x960xf32>
    %4 = arith.mulf %0, %3 : vector<80x960xf32>
    %5 = arith.truncf %4 : vector<80x960xf32> to vector<80x960xbf16>
    %c0_4 = arith.constant 0 : index
    %c0_5 = arith.constant 0 : index
    %c0_6 = arith.constant 0 : index
    %6 = vector.load %arg4[%c0_4, %c0_5, %c0_6] : memref<1x960x196xf32, #tpu.memory_space<vmem>>, vector<1x960x196xf32>
    %7 = vector.shape_cast %6 : vector<1x960x196xf32> to vector<960x196xf32>
    %8 = arith.truncf %7 : vector<960x196xf32> to vector<960x196xbf16>
    %cst = arith.constant dense<0.000000e+00> : vector<80x196xf32>
    %9 = tpu.matmul %5, %8, %cst {dimension_numbers = #tpu.dot_dimension_numbers<[1], [0], [0], [1], [0, 0, 1, 1], [], []>} : vector<80x960xbf16>, vector<960x196xbf16>, vector<80x196xf32> -> vector<80x196xf32>
    %c0_7 = arith.constant 0 : index
    %c0_8 = arith.constant 0 : index
    %c0_9 = arith.constant 0 : index
    %10 = vector.load %arg5[%c0_7, %c0_8, %c0_9] : memref<1x80x196xf32, #tpu.memory_space<vmem>>, vector<1x80x196xf32>
    %11 = vector.shape_cast %10 : vector<1x80x196xf32> to vector<80x196xf32>
    %12 = vector.shape_cast %9 : vector<80x196xf32> to vector<1x80x196xf32>
    tpu.vector_store %arg5[%c0_7, %c0_8, %c0_9], %12 {strides = array<i32>} : memref<1x80x196xf32, #tpu.memory_space<vmem>>, vector<1x80x196xf32>,
    return
  }
  func.func @transform_0(%arg0: i32, %arg1: i32) -> (i32, i32, i32) {
    %c0_i32 = arith.constant 0 : i32
    %c0_i32_0 = arith.constant 0 : i32
    %c0_i32_1 = arith.constant 0 : i32
    return %arg0, %c0_i32, %c0_i32_0 : i32, i32, i32
  }
  func.func @transform_1(%arg0: i32, %arg1: i32) -> (i32, i32) {
    %c0_i32 = arith.constant 0 : i32
    %c0_i32_0 = arith.constant 0 : i32
    return %arg1, %c0_i32 : i32, i32
  }
  func.func @transform_2(%arg0: i32, %arg1: i32) -> (i32, i32, i32) {
    %c0_i32 = arith.constant 0 : i32
    %c0_i32_0 = arith.constant 0 : i32
    %c0_i32_1 = arith.constant 0 : i32
    return %arg0, %c0_i32, %c0_i32_0 : i32, i32, i32
  }
  func.func @transform_3(%arg0: i32, %arg1: i32) -> (i32, i32, i32) {
    %c0_i32 = arith.constant 0 : i32
    %c0_i32_0 = arith.constant 0 : i32
    return %arg0, %arg1, %c0_i32 : i32, i32, i32
  }
}

</mosaic_0001>

<llo_original>
// kernel: fused_scale_conv1x1.1
$region0: #{fused_scale_conv1x1.1}
  #allocation0 [shape = 'u32[]', space=smem, size = 0x4, offset = 0x4, fixed_abs, tag = 'smem constant byte address 0x4 - core index']
  #allocation1 [shape = 'u32[144,128]{1,0:T(1,128)}', space=vmem, size = 0x12000, scoped, tag = 'internal scratch']
  %s0 = inlined_call_operand.vmem [shape: f32[1,1,960], index: 0, kind: input, shape index: {}]
  %s1 = inlined_call_operand.vmem [shape: f32[160,960], index: 1, kind: input, shape index: {}]
  %s2 = inlined_call_operand.vmem [shape: f32[1,960,196], index: 2, kind: input, shape index: {}]
  %s3 = inlined_call_operand.vmem [shape: f32[1,160,196], index: 3, kind: output, shape index: {}]
  %s4 = sld [smem:[#allocation0]]
  $region45: #{fused_scale_conv1x1.1} parent=0
    _
  %s6 = ssub.s32 1, %s4
  %s7 = scalar_select 0, %s6, %s4
  loop: start=0, step=1, limit=4
  $region2: #{fused_scale_conv1x1.1} parent=0 // loop_pre_header
    _
  $region3: #{fused_scale_conv1x1.1} parent=0 // loop_header
    %s9 = sphi 0, %s13
    %p10 = scmp.ge.s32.totalorder %s9, 4
    %s16 = sphi 0, %s28
    %s17 = sphi 0, %s24
    %s18 = sphi 0, %s16
    %s19 = sphi 0, %s17
    %s20 = sphi 0, %s18
    %s21 = sphi 0, %s19
    %s31 = sphi 0, %s33
    %s34 = sphi 0, %s31
    %s35 = sphi 0, %s34
    %s51 = sphi 0, %s35
    %s57 = sphi 0, %s59
    %s60 = sphi 0, %s57
    %s61 = sphi 0, %s60
    %s77 = sphi 0, %s61
    %s83 = sphi 0, %s85
    %s86 = sphi 0, %s83
    %s87 = sphi 0, %s86
    %s103 = sphi 0, %s87
    %s111 = sphi 0, %s113
    %s114 = sphi 0, %s111
    %s115 = sphi 0, %s114
    %s131 = sphi 0, %s115
  $region4: #{fused_scale_conv1x1.1} parent=0 // loop_header_branch
    %12 = sbr.rel (%p10) target = $region8
  $region5: #{fused_scale_conv1x1.1} parent=0 // loop_body
    %s14 = ssub.s32 %s9, 1
    %s15 = ssub.s32 %s9, 2
    %s22 = sadd.s32 1, %s17
    %p23 = scmp.ge.s32.totalorder %s22, 2
    %s24 = scalar_select %p23, 0, %s22
    %s25 = sadd.s32 1, %s16
    %s26 = scalar_select %p23, %s25, %s16
    %p27 = scmp.ge.s32.totalorder %s26, 1
    %s28 = scalar_select %p27, 0, %s26
    %s29 = ssub.s32 %s16, %s28
    %p30 = scmp.eq.s32.totalorder %s29, 0
    %s32 = sadd.s32 %s31, 1
    %s33 = scalar_select %p30, %s31, %s32
    %p36 = pneg %p30
    %p37 = scmp.eq.s32.totalorder %s9, 1
    %p38 = por %p36, %p37
    %p39 = scmp.ne.s32.totalorder %s31, %s34
    %p40 = scmp.eq.s32.totalorder %s9, 0
    %p41 = por %p39, %p40
    %p42 = scmp.ne.s32.totalorder %s31, %s34
    %p43 = scmp.eq.s32.totalorder %s14, 1
    %p44 = por %p42, %p43
    %p45 = scmp.ne.s32.totalorder %s34, %s35
    %p46 = scmp.eq.s32.totalorder %s14, 0
    %p47 = por %p45, %p46
    %p48 = scmp.ne.s32.totalorder %s34, %s35
    %p49 = scmp.eq.s32.totalorder %s15, 1
    %p50 = por %p48, %p49
    %p52 = scmp.ne.s32.totalorder %s35, %s51
    %p53 = scmp.eq.s32.totalorder %s15, 0
    %p54 = por %p52, %p53
    %s55 = ssub.s32 %s17, %s24
    %p56 = scmp.eq.s32.totalorder %s55, 0
    %s58 = sadd.s32 %s57, 1
    %s59 = scalar_select %p56, %s57, %s58
    %p62 = pneg %p56
    %p63 = scmp.eq.s32.totalorder %s9, 1
    %p64 = por %p62, %p63
    %p65 = scmp.ne.s32.totalorder %s57, %s60
    %p66 = scmp.eq.s32.totalorder %s9, 0
    %p67 = por %p65, %p66
    %p68 = scmp.ne.s32.totalorder %s57, %s60
    %p69 = scmp.eq.s32.totalorder %s14, 1
    %p70 = por %p68, %p69
    %p71 = scmp.ne.s32.totalorder %s60, %s61
    %p72 = scmp.eq.s32.totalorder %s14, 0
    %p73 = por %p71, %p72
    %p74 = scmp.ne.s32.totalorder %s60, %s61
    %p75 = scmp.eq.s32.totalorder %s15, 1
    %p76 = por %p74, %p75
    %p78 = scmp.ne.s32.totalorder %s61, %s77
    %p79 = scmp.eq.s32.totalorder %s15, 0
    %p80 = por %p78, %p79
    %s81 = ssub.s32 %s16, %s28
    %p82 = scmp.eq.s32.totalorder %s81, 0
    %s84 = sadd.s32 %s83, 1
    %s85 = scalar_select %p82, %s83, %s84
    %p88 = pneg %p82
    %p89 = scmp.eq.s32.totalorder %s9, 1
    %p90 = por %p88, %p89
    %p91 = scmp.ne.s32.totalorder %s83, %s86
    %p92 = scmp.eq.s32.totalorder %s9, 0
    %p93 = por %p91, %p92
    %p94 = scmp.ne.s32.totalorder %s83, %s86
    %p95 = scmp.eq.s32.totalorder %s14, 1
    %p96 = por %p94, %p95
    %p97 = scmp.ne.s32.totalorder %s86, %s87
    %p98 = scmp.eq.s32.totalorder %s14, 0
    %p99 = por %p97, %p98
    %p100 = scmp.ne.s32.totalorder %s86, %s87
    %p101 = scmp.eq.s32.totalorder %s15, 1
    %p102 = por %p100, %p101
    %p104 = scmp.ne.s32.totalorder %s87, %s103
    %p105 = scmp.eq.s32.totalorder %s15, 0
    %p106 = por %p104, %p105
    %s107 = ssub.s32 %s16, %s28
    %s108 = ssub.s32 %s17, %s24
    %s109 = sor.u32 %s107, %s108
    %p110 = scmp.eq.s32.totalorder %s109, 0
    %s112 = sadd.s32 %s111, 1
    %s113 = scalar_select %p110, %s111, %s112
    %p116 = pneg %p110
    %p117 = scmp.eq.s32.totalorder %s9, 1
    %p118 = por %p116, %p117
    %p119 = scmp.ne.s32.totalorder %s111, %s114
    %p120 = scmp.eq.s32.totalorder %s9, 0
    %p121 = por %p119, %p120
    %p122 = scmp.ne.s32.totalorder %s111, %s114
    %p123 = scmp.eq.s32.totalorder %s14, 1
    %p124 = por %p122, %p123
    %p125 = scmp.ne.s32.totalorder %s114, %s115
    %p126 = scmp.eq.s32.totalorder %s14, 0
    %p127 = por %p125, %p126
    %p128 = scmp.ne.s32.totalorder %s114, %s115
    %p129 = scmp.eq.s32.totalorder %s15, 1
    %p130 = por %p128, %p129
    %p132 = scmp.ne.s32.totalorder %s115, %s131
    %p133 = scmp.eq.s32.totalorder %s15, 0
    %p134 = por %p132, %p133
    %p135 = scmp.le.s32.totalorder 1, %s9
    %p136 = scmp.lt.s32.totalorder %s9, 3
    %p137 = pnand %p135, %p136
    %p138 = pneg %p137
    // Predicated region
    $region9: #{fused_scale_conv1x1.1} parent=5 // pred_check
      _
    $region10: #{fused_scale_conv1x1.1} parent=5 // pred_check_branch
      %140 = sbr.rel (%p137) target = $region12
    $region11: #{fused_scale_conv1x1.1} parent=5 // pred_region
      %s141 = ssub.s32 %s9, 1
      // Predicated region
      $region13: #{fused_scale_conv1x1.1} parent=11 // pred_check
        %p142 = pneg %p47
      $region14: #{fused_scale_conv1x1.1} parent=11 // pred_check_branch
        %144 = sbr.rel (%p142) target = $region16
      $region15: #{fused_scale_conv1x1.1} parent=11 // pred_region
        %p145 = scmp.lt.s32.totalorder %s18, 0
        %s146 = scalar_select %p145, %s18, 0
        %s147 = smul.addr %s146, 8
        %s148 = scalar_lea.vmem %s0, %s147
      $region16: #{fused_scale_conv1x1.1} parent=11 // pred_fallthru
        _
      // Predicated region
      $region17: #{fused_scale_conv1x1.1} parent=11 // pred_check
        %p149 = pneg %p99
      $region18: #{fused_scale_conv1x1.1} parent=11 // pred_check_branch
        %151 = sbr.rel (%p149) target = $region20
      $region19: #{fused_scale_conv1x1.1} parent=11 // pred_region
        %p152 = scmp.lt.s32.totalorder %s18, 0
        %s153 = scalar_select %p152, %s18, 0
        %s154 = smul.addr %s153, 240
        %s155 = smul.addr %s154, 8
        %s156 = scalar_lea.vmem %s2, %s155
      $region20: #{fused_scale_conv1x1.1} parent=11 // pred_fallthru
        _
    $region12: #{fused_scale_conv1x1.1} parent=5 // pred_fallthru
      _
    %p157 = scmp.lt.s32.totalorder %s9, 2
    // Predicated region
    $region21: #{fused_scale_conv1x1.1} parent=5 // pred_check
      %p158 = pneg %p157
    $region22: #{fused_scale_conv1x1.1} parent=5 // pred_check_branch
      %160 = sbr.rel (%p158) target = $region24
    $region23: #{fused_scale_conv1x1.1} parent=5 // pred_region
      // Predicated region
      $region25: #{fused_scale_conv1x1.1} parent=23 // pred_check
        %p161 = pneg %p67
      $region26: #{fused_scale_conv1x1.1} parent=23 // pred_check_branch
        %163 = sbr.rel (%p161) target = $region28
      $region27: #{fused_scale_conv1x1.1} parent=23 // pred_region
        %s164 = smul.u32 10, %s17
        %p165 = scmp.lt.s32.totalorder %s164, 19
        %s166 = scalar_select %p165, %s164, 19
        %s167 = smul.addr %s166, 8
        %s168 = smul.addr %s167, 8
        %s169 = scalar_lea.vmem %s1, %s168
        %s170 = smul.u32 10, %s17
      $region28: #{fused_scale_conv1x1.1} parent=23 // pred_fallthru
        _
    $region24: #{fused_scale_conv1x1.1} parent=5 // pred_fallthru
      _
    %p171 = scmp.le.s32.totalorder 1, %s9
    %p172 = scmp.lt.s32.totalorder %s9, 3
    %p173 = pnand %p171, %p172
    %p174 = pneg %p173
    // Predicated region
    $region29: #{fused_scale_conv1x1.1} parent=5 // pred_check
      _
    $region30: #{fused_scale_conv1x1.1} parent=5 // pred_check_branch
      %176 = sbr.rel (%p173) target = $region32
    $region31: #{fused_scale_conv1x1.1} parent=5 // pred_region
      %s177 = ssub.s32 %s9, 1
      %p178 = scmp.lt.s32.totalorder %s18, 0
      %s179 = scalar_select %p178, %s18, 0
      %s180 = smul.addr %s179, 8
      %s181 = scalar_lea.vmem %s0, %s180
      %p182 = pneg %p47
      %p183 = pneg %p44
      %s184 = smul.u32 10, %s19
      %p185 = scmp.lt.s32.totalorder %s184, 19
      %s186 = scalar_select %p185, %s184, 19
      %s187 = smul.addr %s186, 8
      %s188 = smul.addr %s187, 8
      %s189 = scalar_lea.vmem %s1, %s188
      %p190 = pneg %p73
      %p191 = pneg %p70
      %p192 = scmp.lt.s32.totalorder %s18, 0
      %s193 = scalar_select %p192, %s18, 0
      %s194 = smul.addr %s193, 240
      %s195 = smul.addr %s194, 8
      %s196 = scalar_lea.vmem %s2, %s195
      %p197 = pneg %p99
      %p198 = pneg %p96
      %p199 = pneg %p127
      %p200 = pneg %p124
      %s201 = smul.u32 10, %s19
      %p202 = scmp.lt.s32.totalorder %s18, 0
      %s203 = scalar_select %p202, %s18, 0
      %p204 = scmp.lt.s32.totalorder %s201, 19
      %s205 = scalar_select %p204, %s201, 19
      %s206 = smul.addr %s205, 2
      %s207 = smul.addr %s203, 40
      %s208 = sadd.s32 %s206, %s207
      %s209 = smul.addr %s208, 8
      %s210 = scalar_lea.vmem %s3, %s209
      %p211 = scmp.lt.s32.totalorder %s18, 0
      %s212 = scalar_select %p211, %s18, 0
      %s213 = smul.addr %s212, 8
      %s214 = scalar_lea.vmem %s0, %s213
      %s215 = smul.u32 10, %s19
      %p216 = scmp.lt.s32.totalorder %s215, 19
      %s217 = scalar_select %p216, %s215, 19
      %s218 = smul.addr %s217, 8
      %s219 = smul.addr %s218, 8
      %s220 = scalar_lea.vmem %s1, %s219
      %s221 = smul.u32 10, %s19
      %p222 = scmp.lt.s32.totalorder %s18, 0
      %s223 = scalar_select %p222, %s18, 0
      %s224 = smul.addr %s223, 240
      %s225 = smul.addr %s224, 8
      %s226 = scalar_lea.vmem %s2, %s225
      %s227 = smul.u32 10, %s19
      %p228 = scmp.lt.s32.totalorder %s18, 0
      %s229 = scalar_select %p228, %s18, 0
      %p230 = scmp.lt.s32.totalorder %s227, 19
      %s231 = scalar_select %p230, %s227, 19
      %s232 = smul.addr %s231, 2
      %s233 = smul.addr %s229, 40
      %s234 = sadd.s32 %s232, %s233
      %s235 = smul.addr %s234, 8
      %s236 = scalar_lea.vmem %s3, %s235
      %s237 = smul.u32 10, %s19
      %v239 = vld [vmem:[%s220] sm:$0xff]
      %v240 = vld [vmem:[%s220 + $0x8] sm:$0xff]
      %v241 = vld [vmem:[%s220 + $0x10] sm:$0xff]
      %v242 = vld [vmem:[%s220 + $0x18] sm:$0xff]
      %v243 = vld [vmem:[%s220 + $0x20] sm:$0xff]
      %v244 = vld [vmem:[%s220 + $0x28] sm:$0xff]
      %v245 = vld [vmem:[%s220 + $0x30] sm:$0xff]
      %v246 = vld [vmem:[%s220 + $0x38] sm:$0xff]
      %v247 = vld [vmem:[%s220 + $0x40] sm:$0xff]
      %v248 = vld [vmem:[%s220 + $0x48] sm:$0xff]
      %v249 = vld [vmem:[%s220 + $0x50] sm:$0xff]
      %v250 = vld [vmem:[%s220 + $0x58] sm:$0xff]
      %v251 = vld [vmem:[%s220 + $0x60] sm:$0xff]
      %v252 = vld [vmem:[%s220 + $0x68] sm:$0xff]
      %v253 = vld [vmem:[%s220 + $0x70] sm:$0xff]
      %v254 = vld [vmem:[%s220 + $0x78] sm:$0xff]
      %v255 = vld [vmem:[%s220 + $0x80] sm:$0xff]
      %v256 = vld [vmem:[%s220 + $0x88] sm:$0xff]
      %v257 = vld [vmem:[%s220 + $0x90] sm:$0xff]
      %v258 = vld [vmem:[%s220 + $0x98] sm:$0xff]
      %v259 = vld [vmem:[%s220 + $0xa0] sm:$0xff]
      %v260 = vld [vmem:[%s220 + $0xa8] sm:$0xff]
      %v261 = vld [vmem:[%s220 + $0xb0] sm:$0xff]
      %v262 = vld [vmem:[%s220 + $0xb8] sm:$0xff]
      %v263 = vld [vmem:[%s220 + $0xc0] sm:$0xff]
      %v264 = vld [vmem:[%s220 + $0xc8] sm:$0xff]
      %v265 = vld [vmem:[%s220 + $0xd0] sm:$0xff]
      %v266 = vld [vmem:[%s220 + $0xd8] sm:$0xff]
      %v267 = vld [vmem:[%s220 + $0xe0] sm:$0xff]
      %v268 = vld [vmem:[%s220 + $0xe8] sm:$0xff]
      %v269 = vld [vmem:[%s220 + $0xf0] sm:$0xff]
      %v270 = vld [vmem:[%s220 + $0xf8] sm:$0xff]
      %v271 = vld [vmem:[%s220 + $0x100] sm:$0xff]
      %v272 = vld [vmem:[%s220 + $0x108] sm:$0xff]
      %v273 = vld [vmem:[%s220 + $0x110] sm:$0xff]
      %v274 = vld [vmem:[%s220 + $0x118] sm:$0xff]
      %v275 = vld [vmem:[%s220 + $0x120] sm:$0xff]
      %v276 = vld [vmem:[%s220 + $0x128] sm:$0xff]
      %v277 = vld [vmem:[%s220 + $0x130] sm:$0xff]
      %v278 = vld [vmem:[%s220 + $0x138] sm:$0xff]
      %v279 = vld [vmem:[%s220 + $0x140] sm:$0xff]
      %v280 = vld [vmem:[%s220 + $0x148] sm:$0xff]
      %v281 = vld [vmem:[%s220 + $0x150] sm:$0xff]
      %v282 = vld [vmem:[%s220 + $0x158] sm:$0xff]
      %v283 = vld [vmem:[%s220 + $0x160] sm:$0xff]
      %v284 = vld [vmem:[%s220 + $0x168] sm:$0xff]
      %v285 = vld [vmem:[%s220 + $0x170] sm:$0xff]
      %v286 = vld [vmem:[%s220 + $0x178] sm:$0xff]
      %v287 = vld [vmem:[%s220 + $0x180] sm:$0xff]
      %v288 = vld [vmem:[%s220 + $0x188] sm:$0xff]
      %v289 = vld [vmem:[%s220 + $0x190] sm:$0xff]
      %v290 = vld [vmem:[%s220 + $0x198] sm:$0xff]
      %v291 = vld [vmem:[%s220 + $0x1a0] sm:$0xff]
      %v292 = vld [vmem:[%s220 + $0x1a8] sm:$0xff]
      %v293 = vld [vmem:[%s220 + $0x1b0] sm:$0xff]
      %v294 = vld [vmem:[%s220 + $0x1b8] sm:$0xff]
      %v295 = vld [vmem:[%s220 + $0x1c0] sm:$0xff]
      %v296 = vld [vmem:[%s220 + $0x1c8] sm:$0xff]
      %v297 = vld [vmem:[%s220 + $0x1d0] sm:$0xff]
      %v298 = vld [vmem:[%s220 + $0x1d8] sm:$0xff]
      %v299 = vld [vmem:[%s220 + $0x1e0] sm:$0xff]
      %v300 = vld [vmem:[%s220 + $0x1e8] sm:$0xff]
      %v301 = vld [vmem:[%s220 + $0x1f0] sm:$0xff]
      %v302 = vld [vmem:[%s220 + $0x1f8] sm:$0xff]
      %v303 = vld [vmem:[%s220 + $0x200] sm:$0xff]
      %v304 = vld [vmem:[%s220 + $0x208] sm:$0xff]
      %v305 = vld [vmem:[%s220 + $0x210] sm:$0xff]
      %v306 = vld [vmem:[%s220 + $0x218] sm:$0xff]
      %v307 = vld [vmem:[%s220 + $0x220] sm:$0xff]
      %v308 = vld [vmem:[%s220 + $0x228] sm:$0xff]
      %v309 = vld [vmem:[%s220 + $0x230] sm:$0xff]
      %v310 = vld [vmem:[%s220 + $0x238] sm:$0xff]
      %v311 = vld [vmem:[%s220 + $0x240] sm:$0xff]
      %v312 = vld [vmem:[%s220 + $0x248] sm:$0xff]
      %v313 = vld [vmem:[%s220 + $0x250] sm:$0xff]
      %v314 = vld [vmem:[%s220 + $0x258] sm:$0xff]
      %v315 = vld [vmem:[%s220 + $0x260] sm:$0xff]
      %v316 = vld [vmem:[%s220 + $0x268] sm:$0xff]
      %v317 = vld [vmem:[%s220 + $0x270] sm:$0xff]
      %v318 = vld [vmem:[%s220 + $0x278] sm:$0xff]
      %v319 = vld [vmem:[%s214] sm:$0xff]
      %v321 = vlaneseq
      %v322 = vshrl.u32 %v321, 7
      %v323 = vsub.s32 0, %v322
      %v324 = vrot.slane %v319, %v323
      %v325 = vlaneseq
      %v326 = vshrl.u32 %v325, 7
      %v327 = vsub.s32 1, %v326
      %v328 = vrot.slane %v319, %v327
      %v329 = vlaneseq
      %v330 = vshrl.u32 %v329, 7
      %v331 = vsub.s32 2, %v330
      %v332 = vrot.slane %v319, %v331
      %v333 = vlaneseq
      %v334 = vshrl.u32 %v333, 7
      %v335 = vsub.s32 3, %v334
      %v336 = vrot.slane %v319, %v335
      %v337 = vlaneseq
      %v338 = vshrl.u32 %v337, 7
      %v339 = vsub.s32 4, %v338
      %v340 = vrot.slane %v319, %v339
      %v341 = vlaneseq
      %v342 = vshrl.u32 %v341, 7
      %v343 = vsub.s32 5, %v342
      %v344 = vrot.slane %v319, %v343
      %v345 = vlaneseq
      %v346 = vshrl.u32 %v345, 7
      %v347 = vsub.s32 6, %v346
      %v348 = vrot.slane %v319, %v347
      %v349 = vlaneseq
      %v350 = vshrl.u32 %v349, 7
      %v351 = vsub.s32 7, %v350
      %v352 = vrot.slane %v319, %v351
      %v361 = vmul.f32 %v239, %v324
      %v362 = vmul.f32 %v240, %v328
      %v363 = vmul.f32 %v241, %v332
      %v364 = vmul.f32 %v242, %v336
      %v365 = vmul.f32 %v243, %v340
      %v366 = vmul.f32 %v244, %v344
      %v367 = vmul.f32 %v245, %v348
      %v368 = vmul.f32 %v246, %v352
      %v369 = vmul.f32 %v247, %v324
      %v370 = vmul.f32 %v248, %v328
      %v371 = vmul.f32 %v249, %v332
      %v372 = vmul.f32 %v250, %v336
      %v373 = vmul.f32 %v251, %v340
      %v374 = vmul.f32 %v252, %v344
      %v375 = vmul.f32 %v253, %v348
      %v376 = vmul.f32 %v254, %v352
      %v377 = vmul.f32 %v255, %v324
      %v378 = vmul.f32 %v256, %v328
      %v379 = vmul.f32 %v257, %v332
      %v380 = vmul.f32 %v258, %v336
      %v381 = vmul.f32 %v259, %v340
      %v382 = vmul.f32 %v260, %v344
      %v383 = vmul.f32 %v261, %v348
      %v384 = vmul.f32 %v262, %v352
      %v385 = vmul.f32 %v263, %v324
      %v386 = vmul.f32 %v264, %v328
      %v387 = vmul.f32 %v265, %v332
      %v388 = vmul.f32 %v266, %v336
      %v389 = vmul.f32 %v267, %v340
      %v390 = vmul.f32 %v268, %v344
      %v391 = vmul.f32 %v269, %v348
      %v392 = vmul.f32 %v270, %v352
      %v393 = vmul.f32 %v271, %v324
      %v394 = vmul.f32 %v272, %v328
      %v395 = vmul.f32 %v273, %v332
      %v396 = vmul.f32 %v274, %v336
      %v397 = vmul.f32 %v275, %v340
      %v398 = vmul.f32 %v276, %v344
      %v399 = vmul.f32 %v277, %v348
      %v400 = vmul.f32 %v278, %v352
      %v401 = vmul.f32 %v279, %v324
      %v402 = vmul.f32 %v280, %v328
      %v403 = vmul.f32 %v281, %v332
      %v404 = vmul.f32 %v282, %v336
      %v405 = vmul.f32 %v283, %v340
      %v406 = vmul.f32 %v284, %v344
      %v407 = vmul.f32 %v285, %v348
      %v408 = vmul.f32 %v286, %v352
      %v409 = vmul.f32 %v287, %v324
      %v410 = vmul.f32 %v288, %v328
      %v411 = vmul.f32 %v289, %v332
      %v412 = vmul.f32 %v290, %v336
      %v413 = vmul.f32 %v291, %v340
      %v414 = vmul.f32 %v292, %v344
      %v415 = vmul.f32 %v293, %v348
      %v416 = vmul.f32 %v294, %v352
      %v417 = vmul.f32 %v295, %v324
      %v418 = vmul.f32 %v296, %v328
      %v419 = vmul.f32 %v297, %v332
      %v420 = vmul.f32 %v298, %v336
      %v421 = vmul.f32 %v299, %v340
      %v422 = vmul.f32 %v300, %v344
      %v423 = vmul.f32 %v301, %v348
      %v424 = vmul.f32 %v302, %v352
      %v425 = vmul.f32 %v303, %v324
      %v426 = vmul.f32 %v304, %v328
      %v427 = vmul.f32 %v305, %v332
      %v428 = vmul.f32 %v306, %v336
      %v429 = vmul.f32 %v307, %v340
      %v430 = vmul.f32 %v308, %v344
      %v431 = vmul.f32 %v309, %v348
      %v432 = vmul.f32 %v310, %v352
      %v433 = vmul.f32 %v311, %v324
      %v434 = vmul.f32 %v312, %v328
      %v435 = vmul.f32 %v313, %v332
      %v436 = vmul.f32 %v314, %v336
      %v437 = vmul.f32 %v315, %v340
      %v438 = vmul.f32 %v316, %v344
      %v439 = vmul.f32 %v317, %v348
      %v440 = vmul.f32 %v318, %v352
      %v441 = vpack.c.bf16 %v369, %v361
      %v442 = vpack.c.bf16 %v370, %v362
      %v443 = vpack.c.bf16 %v371, %v363
      %v444 = vpack.c.bf16 %v372, %v364
      %v445 = vpack.c.bf16 %v373, %v365
      %v446 = vpack.c.bf16 %v374, %v366
      %v447 = vpack.c.bf16 %v375, %v367
      %v448 = vpack.c.bf16 %v376, %v368
      %v449 = vpack.c.bf16 %v385, %v377
      %v450 = vpack.c.bf16 %v386, %v378
      %v451 = vpack.c.bf16 %v387, %v379
      %v452 = vpack.c.bf16 %v388, %v380
      %v453 = vpack.c.bf16 %v389, %v381
      %v454 = vpack.c.bf16 %v390, %v382
      %v455 = vpack.c.bf16 %v391, %v383
      %v456 = vpack.c.bf16 %v392, %v384
      %v457 = vpack.c.bf16 %v401, %v393
      %v458 = vpack.c.bf16 %v402, %v394
      %v459 = vpack.c.bf16 %v403, %v395
      %v460 = vpack.c.bf16 %v404, %v396
      %v461 = vpack.c.bf16 %v405, %v397
      %v462 = vpack.c.bf16 %v406, %v398
      %v463 = vpack.c.bf16 %v407, %v399
      %v464 = vpack.c.bf16 %v408, %v400
      %v465 = vpack.c.bf16 %v417, %v409
      %v466 = vpack.c.bf16 %v418, %v410
      %v467 = vpack.c.bf16 %v419, %v411
      %v468 = vpack.c.bf16 %v420, %v412
      %v469 = vpack.c.bf16 %v421, %v413
      %v470 = vpack.c.bf16 %v422, %v414
      %v471 = vpack.c.bf16 %v423, %v415
      %v472 = vpack.c.bf16 %v424, %v416
      %v473 = vpack.c.bf16 %v433, %v425
      %v474 = vpack.c.bf16 %v434, %v426
      %v475 = vpack.c.bf16 %v435, %v427
      %v476 = vpack.c.bf16 %v436, %v428
      %v477 = vpack.c.bf16 %v437, %v429
      %v478 = vpack.c.bf16 %v438, %v430
      %v479 = vpack.c.bf16 %v439, %v431
      %v480 = vpack.c.bf16 %v440, %v432
      %v481 = vld [vmem:[%s226] sm:$0xff]
      %v482 = vld [vmem:[%s226 + $0x8] sm:$0xff]
      %v483 = vld [vmem:[%s226 + $0x10] sm:$0xff]
      %v484 = vld [vmem:[%s226 + $0x18] sm:$0xff]
      %v485 = vld [vmem:[%s226 + $0x20] sm:$0xff]
      %v486 = vld [vmem:[%s226 + $0x28] sm:$0xff]
      %v487 = vld [vmem:[%s226 + $0x30] sm:$0xff]
      %v488 = vld [vmem:[%s226 + $0x38] sm:$0xff]
      %v489 = vld [vmem:[%s226 + $0x40] sm:$0xff]
      %v490 = vld [vmem:[%s226 + $0x48] sm:$0xff]
      %v491 = vld [vmem:[%s226 + $0x50] sm:$0xff]
      %v492 = vld [vmem:[%s226 + $0x58] sm:$0xff]
      %v493 = vld [vmem:[%s226 + $0x60] sm:$0xff]
      %v494 = vld [vmem:[%s226 + $0x68] sm:$0xff]
      %v495 = vld [vmem:[%s226 + $0x70] sm:$0xff]
      %v496 = vld [vmem:[%s226 + $0x78] sm:$0xff]
      %v497 = vld [vmem:[%s226 + $0x80] sm:$0xff]
      %v498 = vld [vmem:[%s226 + $0x88] sm:$0xff]
      %v499 = vld [vmem:[%s226 + $0x90] sm:$0xff]
      %v500 = vld [vmem:[%s226 + $0x98] sm:$0xff]
      %v501 = vld [vmem:[%s226 + $0xa0] sm:$0xff]
      %v502 = vld [vmem:[%s226 + $0xa8] sm:$0xff]
      %v503 = vld [vmem:[%s226 + $0xb0] sm:$0xff]
      %v504 = vld [vmem:[%s226 + $0xb8] sm:$0xff]
      %v505 = vld [vmem:[%s226 + $0xc0] sm:$0xff]
      %v506 = vld [vmem:[%s226 + $0xc8] sm:$0xff]
      %v507 = vld [vmem:[%s226 + $0xd0] sm:$0xff]
      %v508 = vld [vmem:[%s226 + $0xd8] sm:$0xff]
      %v509 = vld [vmem:[%s226 + $0xe0] sm:$0xff]
      %v510 = vld [vmem:[%s226 + $0xe8] sm:$0xff]
      %v511 = vld [vmem:[%s226 + $0xf0] sm:$0xff]
      %v512 = vld [vmem:[%s226 + $0xf8] sm:$0xff]
      %v513 = vld [vmem:[%s226 + $0x100] sm:$0xff]
      %v514 = vld [vmem:[%s226 + $0x108] sm:$0xff]
      %v515 = vld [vmem:[%s226 + $0x110] sm:$0xff]
      %v516 = vld [vmem:[%s226 + $0x118] sm:$0xff]
      %v517 = vld [vmem:[%s226 + $0x120] sm:$0xff]
      %v518 = vld [vmem:[%s226 + $0x128] sm:$0xff]
      %v519 = vld [vmem:[%s226 + $0x130] sm:$0xff]
      %v520 = vld [vmem:[%s226 + $0x138] sm:$0xff]
      %v521 = vld [vmem:[%s226 + $0x140] sm:$0xff]
      %v522 = vld [vmem:[%s226 + $0x148] sm:$0xff]
      %v523 = vld [vmem:[%s226 + $0x150] sm:$0xff]
      %v524 = vld [vmem:[%s226 + $0x158] sm:$0xff]
      %v525 = vld [vmem:[%s226 + $0x160] sm:$0xff]
      %v526 = vld [vmem:[%s226 + $0x168] sm:$0xff]
      %v527 = vld [vmem:[%s226 + $0x170] sm:$0xff]
      %v528 = vld [vmem:[%s226 + $0x178] sm:$0xff]
      %v529 = vld [vmem:[%s226 + $0x180] sm:$0xff]
      %v530 = vld [vmem:[%s226 + $0x188] sm:$0xff]
      %v531 = vld [vmem:[%s226 + $0x190] sm:$0xff]
      %v532 = vld [vmem:[%s226 + $0x198] sm:$0xff]
      %v533 = vld [vmem:[%s226 + $0x1a0] sm:$0xff]
      %v534 = vld [vmem:[%s226 + $0x1a8] sm:$0xff]
      %v535 = vld [vmem:[%s226 + $0x1b0] sm:$0xff]
      %v536 = vld [vmem:[%s226 + $0x1b8] sm:$0xff]
      %v537 = vld [vmem:[%s226 + $0x1c0] sm:$0xff]
      %v538 = vld [vmem:[%s226 + $0x1c8] sm:$0xff]
      %v539 = vld [vmem:[%s226 + $0x1d0] sm:$0xff]
      %v540 = vld [vmem:[%s226 + $0x1d8] sm:$0xff]
      %v541 = vld [vmem:[%s226 + $0x1e0] sm:$0xff]
      %v542 = vld [vmem:[%s226 + $0x1e8] sm:$0xff]
      %v543 = vld [vmem:[%s226 + $0x1f0] sm:$0xff]
      %v544 = vld [vmem:[%s226 + $0x1f8] sm:$0xff]
      %v545 = vld [vmem:[%s226 + $0x200] sm:$0xff]
      %v546 = vld [vmem:[%s226 + $0x208] sm:$0xff]
      %v547 = vld [vmem:[%s226 + $0x210] sm:$0xff]
      %v548 = vld [vmem:[%s226 + $0x218] sm:$0xff]
      %v549 = vld [vmem:[%s226 + $0x220] sm:$0xff]
      %v550 = vld [vmem:[%s226 + $0x228] sm:$0xff]
      %v551 = vld [vmem:[%s226 + $0x230] sm:$0xff]
      %v552 = vld [vmem:[%s226 + $0x238] sm:$0xff]
      %v553 = vld [vmem:[%s226 + $0x240] sm:$0xff]
      %v554 = vld [vmem:[%s226 + $0x248] sm:$0xff]
      %v555 = vld [vmem:[%s226 + $0x250] sm:$0xff]
      %v556 = vld [vmem:[%s226 + $0x258] sm:$0xff]
      %v557 = vld [vmem:[%s226 + $0x260] sm:$0xff]
      %v558 = vld [vmem:[%s226 + $0x268] sm:$0xff]
      %v559 = vld [vmem:[%s226 + $0x270] sm:$0xff]
      %v560 = vld [vmem:[%s226 + $0x278] sm:$0xff]
      %v561 = vld [vmem:[%s226 + $0x280] sm:$0xff]
      %v562 = vld [vmem:[%s226 + $0x288] sm:$0xff]
      %v563 = vld [vmem:[%s226 + $0x290] sm:$0xff]
      %v564 = vld [vmem:[%s226 + $0x298] sm:$0xff]
      %v565 = vld [vmem:[%s226 + $0x2a0] sm:$0xff]
      %v566 = vld [vmem:[%s226 + $0x2a8] sm:$0xff]
      %v567 = vld [vmem:[%s226 + $0x2b0] sm:$0xff]
      %v568 = vld [vmem:[%s226 + $0x2b8] sm:$0xff]
      %v569 = vld [vmem:[%s226 + $0x2c0] sm:$0xff]
      %v570 = vld [vmem:[%s226 + $0x2c8] sm:$0xff]
      %v571 = vld [vmem:[%s226 + $0x2d0] sm:$0xff]
      %v572 = vld [vmem:[%s226 + $0x2d8] sm:$0xff]
      %v573 = vld [vmem:[%s226 + $0x2e0] sm:$0xff]
      %v574 = vld [vmem:[%s226 + $0x2e8] sm:$0xff]
      %v575 = vld [vmem:[%s226 + $0x2f0] sm:$0xff]
      %v576 = vld [vmem:[%s226 + $0x2f8] sm:$0xff]
      %v577 = vld [vmem:[%s226 + $0x300] sm:$0xff]
      %v578 = vld [vmem:[%s226 + $0x308] sm:$0xff]
      %v579 = vld [vmem:[%s226 + $0x310] sm:$0xff]
      %v580 = vld [vmem:[%s226 + $0x318] sm:$0xff]
      %v581 = vld [vmem:[%s226 + $0x320] sm:$0xff]
      %v582 = vld [vmem:[%s226 + $0x328] sm:$0xff]
      %v583 = vld [vmem:[%s226 + $0x330] sm:$0xff]
      %v584 = vld [vmem:[%s226 + $0x338] sm:$0xff]
      %v585 = vld [vmem:[%s226 + $0x340] sm:$0xff]
      %v586 = vld [vmem:[%s226 + $0x348] sm:$0xff]
      %v587 = vld [vmem:[%s226 + $0x350] sm:$0xff]
      %v588 = vld [vmem:[%s226 + $0x358] sm:$0xff]
      %v589 = vld [vmem:[%s226 + $0x360] sm:$0xff]
      %v590 = vld [vmem:[%s226 + $0x368] sm:$0xff]
      %v591 = vld [vmem:[%s226 + $0x370] sm:$0xff]
      %v592 = vld [vmem:[%s226 + $0x378] sm:$0xff]
      %v593 = vld [vmem:[%s226 + $0x380] sm:$0xff]
      %v594 = vld [vmem:[%s226 + $0x388] sm:$0xff]
      %v595 = vld [vmem:[%s226 + $0x390] sm:$0xff]
      %v596 = vld [vmem:[%s226 + $0x398] sm:$0xff]
      %v597 = vld [vmem:[%s226 + $0x3a0] sm:$0xff]
      %v598 = vld [vmem:[%s226 + $0x3a8] sm:$0xff]
      %v599 = vld [vmem:[%s226 + $0x3b0] sm:$0xff]
      %v600 = vld [vmem:[%s226 + $0x3b8] sm:$0xff]
      %v601 = vld [vmem:[%s226 + $0x3c0] sm:$0xff]
      %v602 = vld [vmem:[%s226 + $0x3c8] sm:$0xff]
      %v603 = vld [vmem:[%s226 + $0x3d0] sm:$0xff]
      %v604 = vld [vmem:[%s226 + $0x3d8] sm:$0xff]
      %v605 = vld [vmem:[%s226 + $0x3e0] sm:$0xff]
      %v606 = vld [vmem:[%s226 + $0x3e8] sm:$0xff]
      %v607 = vld [vmem:[%s226 + $0x3f0] sm:$0xff]
      %v608 = vld [vmem:[%s226 + $0x3f8] sm:$0xff]
      %v609 = vld [vmem:[%s226 + $0x400] sm:$0xff]
      %v610 = vld [vmem:[%s226 + $0x408] sm:$0xff]
      %v611 = vld [vmem:[%s226 + $0x410] sm:$0xff]
      %v612 = vld [vmem:[%s226 + $0x418] sm:$0xff]
      %v613 = vld [vmem:[%s226 + $0x420] sm:$0xff]
      %v614 = vld [vmem:[%s226 + $0x428] sm:$0xff]
      %v615 = vld [vmem:[%s226 + $0x430] sm:$0xff]
      %v616 = vld [vmem:[%s226 + $0x438] sm:$0xff]
      %v617 = vld [vmem:[%s226 + $0x440] sm:$0xff]
      %v618 = vld [vmem:[%s226 + $0x448] sm:$0xff]
      %v619 = vld [vmem:[%s226 + $0x450] sm:$0xff]
      %v620 = vld [vmem:[%s226 + $0x458] sm:$0xff]
      %v621 = vld [vmem:[%s226 + $0x460] sm:$0xff]
      %v622 = vld [vmem:[%s226 + $0x468] sm:$0xff]
      %v623 = vld [vmem:[%s226 + $0x470] sm:$0xff]
      %v624 = vld [vmem:[%s226 + $0x478] sm:$0xff]
      %v625 = vld [vmem:[%s226 + $0x480] sm:$0xff]
      %v626 = vld [vmem:[%s226 + $0x488] sm:$0xff]
      %v627 = vld [vmem:[%s226 + $0x490] sm:$0xff]
      %v628 = vld [vmem:[%s226 + $0x498] sm:$0xff]
      %v629 = vld [vmem:[%s226 + $0x4a0] sm:$0xff]
      %v630 = vld [vmem:[%s226 + $0x4a8] sm:$0xff]
      %v631 = vld [vmem:[%s226 + $0x4b0] sm:$0xff]
      %v632 = vld [vmem:[%s226 + $0x4b8] sm:$0xff]
      %v633 = vld [vmem:[%s226 + $0x4c0] sm:$0xff]
      %v634 = vld [vmem:[%s226 + $0x4c8] sm:$0xff]
      %v635 = vld [vmem:[%s226 + $0x4d0] sm:$0xff]
      %v636 = vld [vmem:[%s226 + $0x4d8] sm:$0xff]
      %v637 = vld [vmem:[%s226 + $0x4e0] sm:$0xff]
      %v638 = vld [vmem:[%s226 + $0x4e8] sm:$0xff]
      %v639 = vld [vmem:[%s226 + $0x4f0] sm:$0xff]
      %v640 = vld [vmem:[%s226 + $0x4f8] sm:$0xff]
      %v641 = vld [vmem:[%s226 + $0x500] sm:$0xff]
      %v642 = vld [vmem:[%s226 + $0x508] sm:$0xff]
      %v643 = vld [vmem:[%s226 + $0x510] sm:$0xff]
      %v644 = vld [vmem:[%s226 + $0x518] sm:$0xff]
      %v645 = vld [vmem:[%s226 + $0x520] sm:$0xff]
      %v646 = vld [vmem:[%s226 + $0x528] sm:$0xff]
      %v647 = vld [vmem:[%s226 + $0x530] sm:$0xff]
      %v648 = vld [vmem:[%s226 + $0x538] sm:$0xff]
      %v649 = vld [vmem:[%s226 + $0x540] sm:$0xff]
      %v650 = vld [vmem:[%s226 + $0x548] sm:$0xff]
      %v651 = vld [vmem:[%s226 + $0x550] sm:$0xff]
      %v652 = vld [vmem:[%s226 + $0x558] sm:$0xff]
      %v653 = vld [vmem:[%s226 + $0x560] sm:$0xff]
      %v654 = vld [vmem:[%s226 + $0x568] sm:$0xff]
      %v655 = vld [vmem:[%s226 + $0x570] sm:$0xff]
      %v656 = vld [vmem:[%s226 + $0x578] sm:$0xff]
      %v657 = vld [vmem:[%s226 + $0x580] sm:$0xff]
      %v658 = vld [vmem:[%s226 + $0x588] sm:$0xff]
      %v659 = vld [vmem:[%s226 + $0x590] sm:$0xff]
      %v660 = vld [vmem:[%s226 + $0x598] sm:$0xff]
      %v661 = vld [vmem:[%s226 + $0x5a0] sm:$0xff]
      %v662 = vld [vmem:[%s226 + $0x5a8] sm:$0xff]
      %v663 = vld [vmem:[%s226 + $0x5b0] sm:$0xff]
      %v664 = vld [vmem:[%s226 + $0x5b8] sm:$0xff]
      %v665 = vld [vmem:[%s226 + $0x5c0] sm:$0xff]
      %v666 = vld [vmem:[%s226 + $0x5c8] sm:$0xff]
      %v667 = vld [vmem:[%s226 + $0x5d0] sm:$0xff]
      %v668 = vld [vmem:[%s226 + $0x5d8] sm:$0xff]
      %v669 = vld [vmem:[%s226 + $0x5e0] sm:$0xff]
      %v670 = vld [vmem:[%s226 + $0x5e8] sm:$0xff]
      %v671 = vld [vmem:[%s226 + $0x5f0] sm:$0xff]
      %v672 = vld [vmem:[%s226 + $0x5f8] sm:$0xff]
      %v673 = vld [vmem:[%s226 + $0x600] sm:$0xff]
      %v674 = vld [vmem:[%s226 + $0x608] sm:$0xff]
      %v675 = vld [vmem:[%s226 + $0x610] sm:$0xff]
      %v676 = vld [vmem:[%s226 + $0x618] sm:$0xff]
      %v677 = vld [vmem:[%s226 + $0x620] sm:$0xff]
      %v678 = vld [vmem:[%s226 + $0x628] sm:$0xff]
      %v679 = vld [vmem:[%s226 + $0x630] sm:$0xff]
      %v680 = vld [vmem:[%s226 + $0x638] sm:$0xff]
      %v681 = vld [vmem:[%s226 + $0x640] sm:$0xff]
      %v682 = vld [vmem:[%s226 + $0x648] sm:$0xff]
      %v683 = vld [vmem:[%s226 + $0x650] sm:$0xff]
      %v684 = vld [vmem:[%s226 + $0x658] sm:$0xff]
      %v685 = vld [vmem:[%s226 + $0x660] sm:$0xff]
      %v686 = vld [vmem:[%s226 + $0x668] sm:$0xff]
      %v687 = vld [vmem:[%s226 + $0x670] sm:$0xff]
      %v688 = vld [vmem:[%s226 + $0x678] sm:$0xff]
      %v689 = vld [vmem:[%s226 + $0x680] sm:$0xff]
      %v690 = vld [vmem:[%s226 + $0x688] sm:$0xff]
      %v691 = vld [vmem:[%s226 + $0x690] sm:$0xff]
      %v692 = vld [vmem:[%s226 + $0x698] sm:$0xff]
      %v693 = vld [vmem:[%s226 + $0x6a0] sm:$0xff]
      %v694 = vld [vmem:[%s226 + $0x6a8] sm:$0xff]
      %v695 = vld [vmem:[%s226 + $0x6b0] sm:$0xff]
      %v696 = vld [vmem:[%s226 + $0x6b8] sm:$0xff]
      %v697 = vld [vmem:[%s226 + $0x6c0] sm:$0xff]
      %v698 = vld [vmem:[%s226 + $0x6c8] sm:$0xff]
      %v699 = vld [vmem:[%s226 + $0x6d0] sm:$0xff]
      %v700 = vld [vmem:[%s226 + $0x6d8] sm:$0xff]
      %v701 = vld [vmem:[%s226 + $0x6e0] sm:$0xff]
      %v702 = vld [vmem:[%s226 + $0x6e8] sm:$0xff]
      %v703 = vld [vmem:[%s226 + $0x6f0] sm:$0xff]
      %v704 = vld [vmem:[%s226 + $0x6f8] sm:$0xff]
      %v705 = vld [vmem:[%s226 + $0x700] sm:$0xff]
      %v706 = vld [vmem:[%s226 + $0x708] sm:$0xff]
      %v707 = vld [vmem:[%s226 + $0x710] sm:$0xff]
      %v708 = vld [vmem:[%s226 + $0x718] sm:$0xff]
      %v709 = vld [vmem:[%s226 + $0x720] sm:$0xff]
      %v710 = vld [vmem:[%s226 + $0x728] sm:$0xff]
      %v711 = vld [vmem:[%s226 + $0x730] sm:$0xff]
      %v712 = vld [vmem:[%s226 + $0x738] sm:$0xff]
      %v713 = vld [vmem:[%s226 + $0x740] sm:$0xff]
      %v714 = vld [vmem:[%s226 + $0x748] sm:$0xff]
      %v715 = vld [vmem:[%s226 + $0x750] sm:$0xff]
      %v716 = vld [vmem:[%s226 + $0x758] sm:$0xff]
      %v717 = vld [vmem:[%s226 + $0x760] sm:$0xff]
      %v718 = vld [vmem:[%s226 + $0x768] sm:$0xff]
      %v719 = vld [vmem:[%s226 + $0x770] sm:$0xff]
      %v720 = vld [vmem:[%s226 + $0x778] sm:$0xff]
      %v721 = vpack.c.bf16 %v483, %v481
      %v722 = vpack.c.bf16 %v484, %v482
      %v723 = vpack.c.bf16 %v487, %v485
      %v724 = vpack.c.bf16 %v488, %v486
      %v725 = vpack.c.bf16 %v491, %v489
      %v726 = vpack.c.bf16 %v492, %v490
      %v727 = vpack.c.bf16 %v495, %v493
      %v728 = vpack.c.bf16 %v496, %v494
      %v729 = vpack.c.bf16 %v499, %v497
      %v730 = vpack.c.bf16 %v500, %v498
      %v731 = vpack.c.bf16 %v503, %v501
      %v732 = vpack.c.bf16 %v504, %v502
      %v733 = vpack.c.bf16 %v507, %v505
      %v734 = vpack.c.bf16 %v508, %v506
      %v735 = vpack.c.bf16 %v511, %v509
      %v736 = vpack.c.bf16 %v512, %v510
      %v737 = vpack.c.bf16 %v515, %v513
      %v738 = vpack.c.bf16 %v516, %v514
      %v739 = vpack.c.bf16 %v519, %v517
      %v740 = vpack.c.bf16 %v520, %v518
      %v741 = vpack.c.bf16 %v523, %v521
      %v742 = vpack.c.bf16 %v524, %v522
      %v743 = vpack.c.bf16 %v527, %v525
      %v744 = vpack.c.bf16 %v528, %v526
      %v745 = vpack.c.bf16 %v531, %v529
      %v746 = vpack.c.bf16 %v532, %v530
      %v747 = vpack.c.bf16 %v535, %v533
      %v748 = vpack.c.bf16 %v536, %v534
      %v749 = vpack.c.bf16 %v539, %v537
      %v750 = vpack.c.bf16 %v540, %v538
      %v751 = vpack.c.bf16 %v543, %v541
      %v752 = vpack.c.bf16 %v544, %v542
      %v753 = vpack.c.bf16 %v547, %v545
      %v754 = vpack.c.bf16 %v548, %v546
      %v755 = vpack.c.bf16 %v551, %v549
      %v756 = vpack.c.bf16 %v552, %v550
      %v757 = vpack.c.bf16 %v555, %v553
      %v758 = vpack.c.bf16 %v556, %v554
      %v759 = vpack.c.bf16 %v559, %v557
      %v760 = vpack.c.bf16 %v560, %v558
      %v761 = vpack.c.bf16 %v563, %v561
      %v762 = vpack.c.bf16 %v564, %v562
      %v763 = vpack.c.bf16 %v567, %v565
      %v764 = vpack.c.bf16 %v568, %v566
      %v765 = vpack.c.bf16 %v571, %v569
      %v766 = vpack.c.bf16 %v572, %v570
      %v767 = vpack.c.bf16 %v575, %v573
      %v768 = vpack.c.bf16 %v576, %v574
      %v769 = vpack.c.bf16 %v579, %v577
      %v770 = vpack.c.bf16 %v580, %v578
      %v771 = vpack.c.bf16 %v583, %v581
      %v772 = vpack.c.bf16 %v584, %v582
      %v773 = vpack.c.bf16 %v587, %v585
      %v774 = vpack.c.bf16 %v588, %v586
      %v775 = vpack.c.bf16 %v591, %v589
      %v776 = vpack.c.bf16 %v592, %v590
      %v777 = vpack.c.bf16 %v595, %v593
      %v778 = vpack.c.bf16 %v596, %v594
      %v779 = vpack.c.bf16 %v599, %v597
      %v780 = vpack.c.bf16 %v600, %v598
      %v781 = vpack.c.bf16 %v603, %v601
      %v782 = vpack.c.bf16 %v604, %v602
      %v783 = vpack.c.bf16 %v607, %v605
      %v784 = vpack.c.bf16 %v608, %v606
      %v785 = vpack.c.bf16 %v611, %v609
      %v786 = vpack.c.bf16 %v612, %v610
      %v787 = vpack.c.bf16 %v615, %v613
      %v788 = vpack.c.bf16 %v616, %v614
      %v789 = vpack.c.bf16 %v619, %v617
      %v790 = vpack.c.bf16 %v620, %v618
      %v791 = vpack.c.bf16 %v623, %v621
      %v792 = vpack.c.bf16 %v624, %v622
      %v793 = vpack.c.bf16 %v627, %v625
      %v794 = vpack.c.bf16 %v628, %v626
      %v795 = vpack.c.bf16 %v631, %v629
      %v796 = vpack.c.bf16 %v632, %v630
      %v797 = vpack.c.bf16 %v635, %v633
      %v798 = vpack.c.bf16 %v636, %v634
      %v799 = vpack.c.bf16 %v639, %v637
      %v800 = vpack.c.bf16 %v640, %v638
      %v801 = vpack.c.bf16 %v643, %v641
      %v802 = vpack.c.bf16 %v644, %v642
      %v803 = vpack.c.bf16 %v647, %v645
      %v804 = vpack.c.bf16 %v648, %v646
      %v805 = vpack.c.bf16 %v651, %v649
      %v806 = vpack.c.bf16 %v652, %v650
      %v807 = vpack.c.bf16 %v655, %v653
      %v808 = vpack.c.bf16 %v656, %v654
      %v809 = vpack.c.bf16 %v659, %v657
      %v810 = vpack.c.bf16 %v660, %v658
      %v811 = vpack.c.bf16 %v663, %v661
      %v812 = vpack.c.bf16 %v664, %v662
      %v813 = vpack.c.bf16 %v667, %v665
      %v814 = vpack.c.bf16 %v668, %v666
      %v815 = vpack.c.bf16 %v671, %v669
      %v816 = vpack.c.bf16 %v672, %v670
      %v817 = vpack.c.bf16 %v675, %v673
      %v818 = vpack.c.bf16 %v676, %v674
      %v819 = vpack.c.bf16 %v679, %v677
      %v820 = vpack.c.bf16 %v680, %v678
      %v821 = vpack.c.bf16 %v683, %v681
      %v822 = vpack.c.bf16 %v684, %v682
      %v823 = vpack.c.bf16 %v687, %v685
      %v824 = vpack.c.bf16 %v688, %v686
      %v825 = vpack.c.bf16 %v691, %v689
      %v826 = vpack.c.bf16 %v692, %v690
      %v827 = vpack.c.bf16 %v695, %v693
      %v828 = vpack.c.bf16 %v696, %v694
      %v829 = vpack.c.bf16 %v699, %v697
      %v830 = vpack.c.bf16 %v700, %v698
      %v831 = vpack.c.bf16 %v703, %v701
      %v832 = vpack.c.bf16 %v704, %v702
      %v833 = vpack.c.bf16 %v707, %v705
      %v834 = vpack.c.bf16 %v708, %v706
      %v835 = vpack.c.bf16 %v711, %v709
      %v836 = vpack.c.bf16 %v712, %v710
      %v837 = vpack.c.bf16 %v715, %v713
      %v838 = vpack.c.bf16 %v716, %v714
      %v839 = vpack.c.bf16 %v719, %v717
      %v840 = vpack.c.bf16 %v720, %v718
      %vm841 = vcmask 523264
      %v843 = vsel %vm841, %v448, 0
      %v846 = vsel %vm841, %v456, 0
      %v849 = vsel %vm841, %v464, 0
      %v852 = vsel %vm841, %v472, 0
      %v855 = vsel %vm841, %v480, 0
      %857 = vmatprep.subr.bf16.mxu0 %v722
      %858 = vmatpush1.bf16.msra.mxu0 %v721
      %859 = vmatprep.subr.bf16.mxu0 %v724
      %860 = vmatpush1.bf16.msra.mxu0 %v723
      %861 = vmatprep.subr.bf16.mxu0 %v726
      %862 = vmatpush1.bf16.msra.mxu0 %v725
      %863 = vmatprep.subr.bf16.mxu0 %v728
      %864 = vmatpush1.bf16.msra.mxu0 %v727
      %865 = vmatprep.subr.bf16.mxu0 %v730
      %866 = vmatpush1.bf16.msra.mxu0 %v729
      %867 = vmatprep.subr.bf16.mxu0 %v732
      %868 = vmatpush1.bf16.msra.mxu0 %v731
      %869 = vmatprep.subr.bf16.mxu0 %v734
      %870 = vmatpush1.bf16.msra.mxu0 %v733
      %871 = vmatprep.subr.bf16.mxu0 %v736
      %872 = vmatpush1.bf16.msra.mxu0 %v735
      %873 = vmatprep.subr.bf16.mxu0 %v738
      %874 = vmatpush1.bf16.msra.mxu0 %v737
      %875 = vmatprep.subr.bf16.mxu0 %v740
      %876 = vmatpush1.bf16.msra.mxu0 %v739
      %877 = vmatprep.subr.bf16.mxu0 %v742
      %878 = vmatpush1.bf16.msra.mxu0 %v741
      %879 = vmatprep.subr.bf16.mxu0 %v744
      %880 = vmatpush1.bf16.msra.mxu0 %v743
      %881 = vmatprep.subr.bf16.mxu0 %v746
      %882 = vmatpush1.bf16.msra.mxu0 %v745
      %883 = vmatprep.subr.bf16.mxu0 %v748
      %884 = vmatpush1.bf16.msra.mxu0 %v747
      %885 = vmatprep.subr.bf16.mxu0 %v750
      %886 = vmatpush1.bf16.msra.mxu0 %v749
      %887 = vmatprep.subr.bf16.mxu0 %v752
      %888 = vmatpush1.bf16.msra.mxu0 %v751
      %889 = vmatprep.mubr.bf16.mxu0 %v442
      %890 = vmatmul.mubr.bf16.gmra.mrb[0].mxu0 %v441
      %v891 = vpop.f32.mrb[0].mxu0
      %v892 = vadd.f32 0.0, %v891
      %v893 = vpop.f32.mrb[0].mxu0
      %v894 = vadd.f32 0.0, %v893
      %v895 = vpop.f32.mrb[0].mxu0
      %v896 = vadd.f32 0.0, %v895
      %v897 = vpop.f32.mrb[0].mxu0
      %v898 = vadd.f32 0.0, %v897
      %899 = vmatprep.mubr.bf16.mxu0 %v450
      %900 = vmatmul.mubr.bf16.gmra.mrb[0].mxu0 %v449
      %v901 = vpop.f32.mrb[0].mxu0
      %v902 = vadd.f32 0.0, %v901
      %v903 = vpop.f32.mrb[0].mxu0
      %v904 = vadd.f32 0.0, %v903
      %v905 = vpop.f32.mrb[0].mxu0
      %v906 = vadd.f32 0.0, %v905
      %v907 = vpop.f32.mrb[0].mxu0
      %v908 = vadd.f32 0.0, %v907
      %909 = vmatprep.mubr.bf16.mxu0 %v458
      %910 = vmatmul.mubr.bf16.gmra.mrb[0].mxu0 %v457
      %v911 = vpop.f32.mrb[0].mxu0
      %v912 = vadd.f32 0.0, %v911
      %v913 = vpop.f32.mrb[0].mxu0
      %v914 = vadd.f32 0.0, %v913
      %v915 = vpop.f32.mrb[0].mxu0
      %v916 = vadd.f32 0.0, %v915
      %v917 = vpop.f32.mrb[0].mxu0
      %v918 = vadd.f32 0.0, %v917
      %919 = vmatprep.mubr.bf16.mxu0 %v466
      %920 = vmatmul.mubr.bf16.gmra.mrb[0].mxu0 %v465
      %v921 = vpop.f32.mrb[0].mxu0
      %v922 = vadd.f32 0.0, %v921
      %v923 = vpop.f32.mrb[0].mxu0
      %v924 = vadd.f32 0.0, %v923
      %v925 = vpop.f32.mrb[0].mxu0
      %v926 = vadd.f32 0.0, %v925
      %v927 = vpop.f32.mrb[0].mxu0
      %v928 = vadd.f32 0.0, %v927
      %929 = vmatprep.mubr.bf16.mxu0 %v474
      %930 = vmatmul.mubr.bf16.gmra.mrb[0].mxu0 %v473
      %v931 = vpop.f32.mrb[0].mxu0
      %v932 = vadd.f32 0.0, %v931
      %v933 = vpop.f32.mrb[0].mxu0
      %v934 = vadd.f32 0.0, %v933
      %v935 = vpop.f32.mrb[0].mxu0
      %v936 = vadd.f32 0.0, %v935
      %v937 = vpop.f32.mrb[0].mxu0
      %v938 = vadd.f32 0.0, %v937
      %939 = vdwg.mxu0
      %940 = vmatprep.subr.bf16.mxu0 %v754
      %941 = vmatpush1.bf16.msra.mxu0 %v753
      %942 = vmatprep.subr.bf16.mxu0 %v756
      %943 = vmatpush1.bf16.msra.mxu0 %v755
      %944 = vmatprep.subr.bf16.mxu0 %v758
      %945 = vmatpush1.bf16.msra.mxu0 %v757
      %946 = vmatprep.subr.bf16.mxu0 %v760
      %947 = vmatpush1.bf16.msra.mxu0 %v759
      %948 = vmatprep.subr.bf16.mxu0 %v762
      %949 = vmatpush1.bf16.msra.mxu0 %v761
      %950 = vmatprep.subr.bf16.mxu0 %v764
      %951 = vmatpush1.bf16.msra.mxu0 %v763
      %952 = vmatprep.subr.bf16.mxu0 %v766
      %953 = vmatpush1.bf16.msra.mxu0 %v765
      %954 = vmatprep.subr.bf16.mxu0 %v768
      %955 = vmatpush1.bf16.msra.mxu0 %v767
      %956 = vmatprep.subr.bf16.mxu0 %v770
      %957 = vmatpush1.bf16.msra.mxu0 %v769
      %958 = vmatprep.subr.bf16.mxu0 %v772
      %959 = vmatpush1.bf16.msra.mxu0 %v771
      %960 = vmatprep.subr.bf16.mxu0 %v774
      %961 = vmatpush1.bf16.msra.mxu0 %v773
      %962 = vmatprep.subr.bf16.mxu0 %v776
      %963 = vmatpush1.bf16.msra.mxu0 %v775
      %964 = vmatprep.subr.bf16.mxu0 %v778
      %965 = vmatpush1.bf16.msra.mxu0 %v777
      %966 = vmatprep.subr.bf16.mxu0 %v780
      %967 = vmatpush1.bf16.msra.mxu0 %v779
      %968 = vmatprep.subr.bf16.mxu0 %v782
      %969 = vmatpush1.bf16.msra.mxu0 %v781
      %970 = vmatprep.subr.bf16.mxu0 %v784
      %971 = vmatpush1.bf16.msra.mxu0 %v783
      %972 = vmatprep.mubr.bf16.mxu0 %v444
      %973 = vmatmul.mubr.bf16.gmra.mrb[0].mxu0 %v443
      %v974 = vpop.f32.mrb[0].mxu0
      %v975 = vadd.f32 %v892, %v974
      %v976 = vpop.f32.mrb[0].mxu0
      %v977 = vadd.f32 %v894, %v976
      %v978 = vpop.f32.mrb[0].mxu0
      %v979 = vadd.f32 %v896, %v978
      %v980 = vpop.f32.mrb[0].mxu0
      %v981 = vadd.f32 %v898, %v980
      %982 = vmatprep.mubr.bf16.mxu0 %v452
      %983 = vmatmul.mubr.bf16.gmra.mrb[0].mxu0 %v451
      %v984 = vpop.f32.mrb[0].mxu0
      %v985 = vadd.f32 %v902, %v984
      %v986 = vpop.f32.mrb[0].mxu0
      %v987 = vadd.f32 %v904, %v986
      %v988 = vpop.f32.mrb[0].mxu0
      %v989 = vadd.f32 %v906, %v988
      %v990 = vpop.f32.mrb[0].mxu0
      %v991 = vadd.f32 %v908, %v990
      %992 = vmatprep.mubr.bf16.mxu0 %v460
      %993 = vmatmul.mubr.bf16.gmra.mrb[0].mxu0 %v459
      %v994 = vpop.f32.mrb[0].mxu0
      %v995 = vadd.f32 %v912, %v994
      %v996 = vpop.f32.mrb[0].mxu0
      %v997 = vadd.f32 %v914, %v996
      %v998 = vpop.f32.mrb[0].mxu0
      %v999 = vadd.f32 %v916, %v998
      %v1000 = vpop.f32.mrb[0].mxu0
      %v1001 = vadd.f32 %v918, %v1000
      %1002 = vmatprep.mubr.bf16.mxu0 %v468
      %1003 = vmatmul.mubr.bf16.gmra.mrb[0].mxu0 %v467
      %v1004 = vpop.f32.mrb[0].mxu0
      %v1005 = vadd.f32 %v922, %v1004
      %v1006 = vpop.f32.mrb[0].mxu0
      %v1007 = vadd.f32 %v924, %v1006
      %v1008 = vpop.f32.mrb[0].mxu0
      %v1009 = vadd.f32 %v926, %v1008
      %v1010 = vpop.f32.mrb[0].mxu0
      %v1011 = vadd.f32 %v928, %v1010
      %1012 = vmatprep.mubr.bf16.mxu0 %v476
      %1013 = vmatmul.mubr.bf16.gmra.mrb[0].mxu0 %v475
      %v1014 = vpop.f32.mrb[0].mxu0
      %v1015 = vadd.f32 %v932, %v1014
      %v1016 = vpop.f32.mrb[0].mxu0
      %v1017 = vadd.f32 %v934, %v1016
      %v1018 = vpop.f32.mrb[0].mxu0
      %v1019 = vadd.f32 %v936, %v1018
      %v1020 = vpop.f32.mrb[0].mxu0
      %v1021 = vadd.f32 %v938, %v1020
      %1022 = vdwg.mxu0
      %1023 = vmatprep.subr.bf16.mxu0 %v786
      %1024 = vmatpush1.bf16.msra.mxu0 %v785
      %1025 = vmatprep.subr.bf16.mxu0 %v788
      %1026 = vmatpush1.bf16.msra.mxu0 %v787
      %1027 = vmatprep.subr.bf16.mxu0 %v790
      %1028 = vmatpush1.bf16.msra.mxu0 %v789
      %1029 = vmatprep.subr.bf16.mxu0 %v792
      %1030 = vmatpush1.bf16.msra.mxu0 %v791
      %1031 = vmatprep.subr.bf16.mxu0 %v794
      %1032 = vmatpush1.bf16.msra.mxu0 %v793
      %1033 = vmatprep.subr.bf16.mxu0 %v796
      %1034 = vmatpush1.bf16.msra.mxu0 %v795
      %1035 = vmatprep.subr.bf16.mxu0 %v798
      %1036 = vmatpush1.bf16.msra.mxu0 %v797
      %1037 = vmatprep.subr.bf16.mxu0 %v800
      %1038 = vmatpush1.bf16.msra.mxu0 %v799
      %1039 = vmatprep.subr.bf16.mxu0 %v802
      %1040 = vmatpush1.bf16.msra.mxu0 %v801
      %1041 = vmatprep.subr.bf16.mxu0 %v804
      %1042 = vmatpush1.bf16.msra.mxu0 %v803
      %1043 = vmatprep.subr.bf16.mxu0 %v806
      %1044 = vmatpush1.bf16.msra.mxu0 %v805
      %1045 = vmatprep.subr.bf16.mxu0 %v808
      %1046 = vmatpush1.bf16.msra.mxu0 %v807
      %1047 = vmatprep.subr.bf16.mxu0 %v810
      %1048 = vmatpush1.bf16.msra.mxu0 %v809
      %1049 = vmatprep.subr.bf16.mxu0 %v812
      %1050 = vmatpush1.bf16.msra.mxu0 %v811
      %1051 = vmatprep.subr.bf16.mxu0 %v814
      %1052 = vmatpush1.bf16.msra.mxu0 %v813
      %1053 = vmatprep.subr.bf16.mxu0 %v816
      %1054 = vmatpush1.bf16.msra.mxu0 %v815
      %1055 = vmatprep.mubr.bf16.mxu0 %v446
      %1056 = vmatmul.mubr.bf16.gmra.mrb[0].mxu0 %v445
      %v1057 = vpop.f32.mrb[0].mxu0
      %v1058 = vadd.f32 %v975, %v1057
      %v1059 = vpop.f32.mrb[0].mxu0
      %v1060 = vadd.f32 %v977, %v1059
      %v1061 = vpop.f32.mrb[0].mxu0
      %v1062 = vadd.f32 %v979, %v1061
      %v1063 = vpop.f32.mrb[0].mxu0
      %v1064 = vadd.f32 %v981, %v1063
      %1065 = vmatprep.mubr.bf16.mxu0 %v454
      %1066 = vmatmul.mubr.bf16.gmra.mrb[0].mxu0 %v453
      %v1067 = vpop.f32.mrb[0].mxu0
      %v1068 = vadd.f32 %v985, %v1067
      %v1069 = vpop.f32.mrb[0].mxu0
      %v1070 = vadd.f32 %v987, %v1069
      %v1071 = vpop.f32.mrb[0].mxu0
      %v1072 = vadd.f32 %v989, %v1071
      %v1073 = vpop.f32.mrb[0].mxu0
      %v1074 = vadd.f32 %v991, %v1073
      %1075 = vmatprep.mubr.bf16.mxu0 %v462
      %1076 = vmatmul.mubr.bf16.gmra.mrb[0].mxu0 %v461
      %v1077 = vpop.f32.mrb[0].mxu0
      %v1078 = vadd.f32 %v995, %v1077
      %v1079 = vpop.f32.mrb[0].mxu0
      %v1080 = vadd.f32 %v997, %v1079
      %v1081 = vpop.f32.mrb[0].mxu0
      %v1082 = vadd.f32 %v999, %v1081
      %v1083 = vpop.f32.mrb[0].mxu0
      %v1084 = vadd.f32 %v1001, %v1083
      %1085 = vmatprep.mubr.bf16.mxu0 %v470
      %1086 = vmatmul.mubr.bf16.gmra.mrb[0].mxu0 %v469
      %v1087 = vpop.f32.mrb[0].mxu0
      %v1088 = vadd.f32 %v1005, %v1087
      %v1089 = vpop.f32.mrb[0].mxu0
      %v1090 = vadd.f32 %v1007, %v1089
      %v1091 = vpop.f32.mrb[0].mxu0
      %v1092 = vadd.f32 %v1009, %v1091
      %v1093 = vpop.f32.mrb[0].mxu0
      %v1094 = vadd.f32 %v1011, %v1093
      %1095 = vmatprep.mubr.bf16.mxu0 %v478
      %1096 = vmatmul.mubr.bf16.gmra.mrb[0].mxu0 %v477
      %v1097 = vpop.f32.mrb[0].mxu0
      %v1098 = vadd.f32 %v1015, %v1097
      %v1099 = vpop.f32.mrb[0].mxu0
      %v1100 = vadd.f32 %v1017, %v1099
      %v1101 = vpop.f32.mrb[0].mxu0
      %v1102 = vadd.f32 %v1019, %v1101
      %v1103 = vpop.f32.mrb[0].mxu0
      %v1104 = vadd.f32 %v1021, %v1103
      %1105 = vdwg.mxu0
      %1106 = vmatprep.subr.bf16.mxu0 %v818
      %1107 = vmatpush1.bf16.msra.mxu0 %v817
      %1108 = vmatprep.subr.bf16.mxu0 %v820
      %1109 = vmatpush1.bf16.msra.mxu0 %v819
      %1110 = vmatprep.subr.bf16.mxu0 %v822
      %1111 = vmatpush1.bf16.msra.mxu0 %v821
      %1112 = vmatprep.subr.bf16.mxu0 %v824
      %1113 = vmatpush1.bf16.msra.mxu0 %v823
      %1114 = vmatprep.subr.bf16.mxu0 %v826
      %1115 = vmatpush1.bf16.msra.mxu0 %v825
      %1116 = vmatprep.subr.bf16.mxu0 %v828
      %1117 = vmatpush1.bf16.msra.mxu0 %v827
      %1118 = vmatprep.subr.bf16.mxu0 %v830
      %1119 = vmatpush1.bf16.msra.mxu0 %v829
      %1120 = vmatprep.subr.bf16.mxu0 %v832
      %1121 = vmatpush1.bf16.msra.mxu0 %v831
      %1122 = vmatprep.subr.bf16.mxu0 %v834
      %1123 = vmatpush1.bf16.msra.mxu0 %v833
      %1124 = vmatprep.subr.bf16.mxu0 %v836
      %1125 = vmatpush1.bf16.msra.mxu0 %v835
      %1126 = vmatprep.subr.bf16.mxu0 %v838
      %1127 = vmatpush1.bf16.msra.mxu0 %v837
      %1128 = vmatprep.subr.bf16.mxu0 %v840
      %1129 = vmatpush1.bf16.msra.mxu0 %v839
      %1130 = vmatprep.subr.bf16.mxu0 0
      %1131 = vmatpush1.bf16.msra.mxu0 0
      %1132 = vmatprep.subr.bf16.mxu0 0
      %1133 = vmatpush1.bf16.msra.mxu0 0
      %1134 = vmatprep.subr.bf16.mxu0 0
      %1135 = vmatpush1.bf16.msra.mxu0 0
      %1136 = vmatprep.subr.bf16.mxu0 0
      %1137 = vmatpush1.bf16.msra.mxu0 0
      %1138 = vmatprep.mubr.bf16.mxu0 %v843
      %1139 = vmatmul.mubr.bf16.gmra.mrb[0].mxu0 %v447
      %v1140 = vpop.f32.mrb[0].mxu0
      %v1141 = vadd.f32 %v1058, %v1140
      %v1142 = vpop.f32.mrb[0].mxu0
      %v1143 = vadd.f32 %v1060, %v1142
      %v1144 = vpop.f32.mrb[0].mxu0
      %v1145 = vadd.f32 %v1062, %v1144
      %v1146 = vpop.f32.mrb[0].mxu0
      %v1147 = vadd.f32 %v1064, %v1146
      %1148 = vmatprep.mubr.bf16.mxu0 %v846
      %1149 = vmatmul.mubr.bf16.gmra.mrb[0].mxu0 %v455
      %v1150 = vpop.f32.mrb[0].mxu0
      %v1151 = vadd.f32 %v1068, %v1150
      %v1152 = vpop.f32.mrb[0].mxu0
      %v1153 = vadd.f32 %v1070, %v1152
      %v1154 = vpop.f32.mrb[0].mxu0
      %v1155 = vadd.f32 %v1072, %v1154
      %v1156 = vpop.f32.mrb[0].mxu0
      %v1157 = vadd.f32 %v1074, %v1156
      %1158 = vmatprep.mubr.bf16.mxu0 %v849
      %1159 = vmatmul.mubr.bf16.gmra.mrb[0].mxu0 %v463
      %v1160 = vpop.f32.mrb[0].mxu0
      %v1161 = vadd.f32 %v1078, %v1160
      %v1162 = vpop.f32.mrb[0].mxu0
      %v1163 = vadd.f32 %v1080, %v1162
      %v1164 = vpop.f32.mrb[0].mxu0
      %v1165 = vadd.f32 %v1082, %v1164
      %v1166 = vpop.f32.mrb[0].mxu0
      %v1167 = vadd.f32 %v1084, %v1166
      %1168 = vmatprep.mubr.bf16.mxu0 %v852
      %1169 = vmatmul.mubr.bf16.gmra.mrb[0].mxu0 %v471
      %v1170 = vpop.f32.mrb[0].mxu0
      %v1171 = vadd.f32 %v1088, %v1170
      %v1172 = vpop.f32.mrb[0].mxu0
      %v1173 = vadd.f32 %v1090, %v1172
      %v1174 = vpop.f32.mrb[0].mxu0
      %v1175 = vadd.f32 %v1092, %v1174
      %v1176 = vpop.f32.mrb[0].mxu0
      %v1177 = vadd.f32 %v1094, %v1176
      %1178 = vmatprep.mubr.bf16.mxu0 %v855
      %1179 = vmatmul.mubr.bf16.gmra.mrb[0].mxu0 %v479
      %v1180 = vpop.f32.mrb[0].mxu0
      %v1181 = vadd.f32 %v1098, %v1180
      %v1182 = vpop.f32.mrb[0].mxu0
      %v1183 = vadd.f32 %v1100, %v1182
      %v1184 = vpop.f32.mrb[0].mxu0
      %v1185 = vadd.f32 %v1102, %v1184
      %v1186 = vpop.f32.mrb[0].mxu0
      %v1187 = vadd.f32 %v1104, %v1186
      %1188 = vdwg.mxu0
      %1189 = vst [vmem:[%s236] sm:$0xff] %v1141
      %vm1190 = vcmask 556032
      %1191 = vst.msk [vmem:[%s236 + $0x8] sm:$0xff] %vm1190, %v1143
      %1192 = vst [vmem:[%s236 + $0x10] sm:$0xff] %v1145
      %1193 = vst.msk [vmem:[%s236 + $0x18] sm:$0xff] %vm1190, %v1147
      %1194 = vst [vmem:[%s236 + $0x20] sm:$0xff] %v1151
      %1195 = vst.msk [vmem:[%s236 + $0x28] sm:$0xff] %vm1190, %v1153
      %1196 = vst [vmem:[%s236 + $0x30] sm:$0xff] %v1155
      %1197 = vst.msk [vmem:[%s236 + $0x38] sm:$0xff] %vm1190, %v1157
      %1198 = vst [vmem:[%s236 + $0x40] sm:$0xff] %v1161
      %1199 = vst.msk [vmem:[%s236 + $0x48] sm:$0xff] %vm1190, %v1163
      %1200 = vst [vmem:[%s236 + $0x50] sm:$0xff] %v1165
      %1201 = vst.msk [vmem:[%s236 + $0x58] sm:$0xff] %vm1190, %v1167
      %1202 = vst [vmem:[%s236 + $0x60] sm:$0xff] %v1171
      %1203 = vst.msk [vmem:[%s236 + $0x68] sm:$0xff] %vm1190, %v1173
      %1204 = vst [vmem:[%s236 + $0x70] sm:$0xff] %v1175
      %1205 = vst.msk [vmem:[%s236 + $0x78] sm:$0xff] %vm1190, %v1177
      %1206 = vst [vmem:[%s236 + $0x80] sm:$0xff] %v1181
      %1207 = vst.msk [vmem:[%s236 + $0x88] sm:$0xff] %vm1190, %v1183
      %1208 = vst [vmem:[%s236 + $0x90] sm:$0xff] %v1185
      %1209 = vst.msk [vmem:[%s236 + $0x98] sm:$0xff] %vm1190, %v1187
      %s1210 = smul.u32 10, %s19
      %p1211 = scmp.lt.s32.totalorder %s18, 0
      %s1212 = scalar_select %p1211, %s18, 0
      %p1213 = scmp.lt.s32.totalorder %s1210, 19
      %s1214 = scalar_select %p1213, %s1210, 19
      %s1215 = smul.addr %s1214, 2
      %s1216 = smul.addr %s1212, 40
      %s1217 = sadd.s32 %s1215, %s1216
      %s1218 = smul.addr %s1217, 8
      %s1219 = scalar_lea.vmem %s3, %s1218
      // Predicated region
      $region33: #{fused_scale_conv1x1.1} parent=31 // pred_check
        %p1220 = pneg %p124
      $region34: #{fused_scale_conv1x1.1} parent=31 // pred_check_branch
        %1222 = sbr.rel (%p1220) target = $region36
      $region35: #{fused_scale_conv1x1.1} parent=31 // pred_region
        %s1223 = smul.u32 10, %s19
      $region36: #{fused_scale_conv1x1.1} parent=31 // pred_fallthru
        _
    $region32: #{fused_scale_conv1x1.1} parent=5 // pred_fallthru
      _
    %p1224 = scmp.le.s32.totalorder 2, %s9
    // Predicated region
    $region37: #{fused_scale_conv1x1.1} parent=5 // pred_check
      %p1225 = pneg %p1224
    $region38: #{fused_scale_conv1x1.1} parent=5 // pred_check_branch
      %1227 = sbr.rel (%p1225) target = $region40
    $region39: #{fused_scale_conv1x1.1} parent=5 // pred_region
      %s1228 = ssub.s32 %s9, 2
      // Predicated region
      $region41: #{fused_scale_conv1x1.1} parent=39 // pred_check
        %p1229 = pneg %p130
      $region42: #{fused_scale_conv1x1.1} parent=39 // pred_check_branch
        %1231 = sbr.rel (%p1229) target = $region44
      $region43: #{fused_scale_conv1x1.1} parent=39 // pred_region
        %s1232 = smul.u32 10, %s21
        %p1233 = scmp.lt.s32.totalorder %s20, 0
        %s1234 = scalar_select %p1233, %s20, 0
        %p1235 = scmp.lt.s32.totalorder %s1232, 19
        %s1236 = scalar_select %p1235, %s1232, 19
        %s1237 = smul.addr %s1236, 2
        %s1238 = smul.addr %s1234, 40
        %s1239 = sadd.s32 %s1237, %s1238
        %s1240 = smul.addr %s1239, 8
        %s1241 = scalar_lea.vmem %s3, %s1240
      $region44: #{fused_scale_conv1x1.1} parent=39 // pred_fallthru
        _
    $region40: #{fused_scale_conv1x1.1} parent=5 // pred_fallthru
      _
  $region6: #{fused_scale_conv1x1.1} parent=0 // loop_footer
    %s13 = sadd.s32 1, %s9
  $region7: #{fused_scale_conv1x1.1} parent=0 // loop_footer_branch
    %8 = sbr.rel target = $region3
  $region8: #{fused_scale_conv1x1.1} parent=0 // loop_exit
    _

</llo_original>
